<compile_context>
chip_gen: v5e
topology: v5e:2x2
jax: 0.10.0
libtpu: 0.0.40
codegen_flags: <defaults>
</compile_context>

<pallas_src>
import jax
import jax.numpy as jnp
from jax.experimental import pallas as pl
from jax.experimental.pallas import tpu as pltpu

BN_EPS = 1e-5  # PyTorch BatchNorm2d default


def _conv_stats_kernel(x_ref, w_ref, y_ref, stats_ref):
    # x_ref:     (TH, KH*Wp*Cin)  bf16  row-tile of kh-concatenated padded input
    # w_ref:     (KH*Wp*Cin, WC)  bf16  banded "im2col of the weights"
    # y_ref:     (TH, WC)         bf16  conv output tile (lane dense, WC=Wo*Cout)
    # stats_ref: (1, 2, WC)       f32   per-tile partial sum / sum-of-squares
    acc = jnp.dot(x_ref[...], w_ref[...], preferred_element_type=jnp.float32)
    # Streaming BN statistics from the f32 accumulator, one (2, WC) store.
    stats_ref[0] = jnp.concatenate(
        [jnp.sum(acc, axis=0, keepdims=True),
         jnp.sum(acc * acc, axis=0, keepdims=True)], axis=0)
    y_ref[...] = acc.astype(y_ref.dtype)  # lane-dense full-width bf16 store


def _bn_relu_kernel(y_ref, scale_ref, shift_ref, o_ref):
    # y_ref/o_ref: (TH, WC) bf16 (o aliases y); scale/shift: (1, WC) f32
    # (per-channel scale/shift pre-tiled over Wo -> pure lane-dense elementwise;
    #  math in f32 since v5e has no bf16 VALU.)
    y = y_ref[...].astype(jnp.float32)
    o_ref[...] = jnp.maximum(y * scale_ref[...] + shift_ref[...], 0.0
                             ).astype(o_ref.dtype)


def _pick_row_tile(total_rows):
    """Largest MXU-friendly row tile, preferring >= 2 grid steps (megacore)."""
    best = None
    for th in (512, 256, 128, 64, 32, 16, 8):
        if total_rows % th == 0:
            if best is None:
                best = th
            if total_rows // th >= 2:
                return th
    return best if best is not None else total_rows


def _vmem_limit_bytes(block_bytes):
    # Double-buffered pipeline blocks + headroom, clamped to a ceiling that is
    # safe on v7x's 64 MiB physical VMEM.
    need = 2 * int(block_bytes)
    return int(min(max(4 * need, 16 << 20), 48 << 20))


def conv_bn_relu(x_nchw, w_oihw, bias, gamma, beta, padding):
    """Forward of the PyTorch `conv` module (training-mode BatchNorm)."""
    del bias  # Cancels exactly under training-mode BN (forward output only).
    N, Cin, H, W = x_nchw.shape
    Cout, _, KH, KW = w_oihw.shape
    Hp, Wp = H + 2 * padding, W + 2 * padding
    Ho, Wo = Hp - KH + 1, Wp - KW + 1
    WPC, WC, K = Wp * Cin, Wo * Cout, KH * Wp * Cin
    TOT = N * Ho
    TH = _pick_row_tile(TOT)
    n_t = TOT // TH

    # ---- wrapper glue: bf16 NHWC, zero padding, kh-concat rows, banded w ----
    x = jnp.transpose(x_nchw, (0, 2, 3, 1)).astype(jnp.bfloat16)      # NHWC
    x = jnp.pad(x, ((0, 0), (padding, padding), (padding, padding), (0, 0)))
    x = x.reshape(N, Hp, WPC)
    # Partial im2col along kernel-height only: the LHS row for output row
    # (n, r) is padded rows r..r+KH-1 concatenated on the K/lane axis, so the
    # kernel needs no shifted (misaligned) sublane windows at all.
    x_cat = jnp.concatenate([x[:, kh:kh + Ho, :] for kh in range(KH)], axis=-1)
    x_cat = x_cat.reshape(TOT, K)
    # TODO(synk): for large feature maps switch to halo row tiles + shifted-slab
    # matmuls (pltpu.roll) — the banded weight below is O(W^2*Cin*Cout*KH) in
    # VMEM and does ~Wp/KW extra (zero) FLOPs; fine only for small W.

    # Banded weight: w_cat[kh*WPC + w_in*Cin + ci, w_out*Cout + co] =
    #   w[co, ci, kh, w_in - w_out] if 0 <= w_in - w_out < KW else 0,
    # so x_cat @ w_cat is directly the lane-dense (rows, Wo*Cout) conv output.
    w_hwio = jnp.transpose(w_oihw, (2, 3, 1, 0)).astype(jnp.float32)  # KH,KW,Cin,Cout
    band = (jnp.arange(Wp)[:, None, None]
            == jnp.arange(Wo)[None, :, None] + jnp.arange(KW)[None, None, :]
            ).astype(jnp.float32)                                     # (Wp, Wo, KW)
    w_cat = jnp.einsum("iok,hkcd->hicod", band, w_hwio)
    w_cat = w_cat.reshape(K, WC).astype(jnp.bfloat16)

    block_bytes = 2 * (TH * K + K * WC + TH * WC) + 4 * 2 * WC
    vmem_limit = _vmem_limit_bytes(block_bytes)

    # ---- pass 1: conv (one MXU matmul per tile) + streaming BN partials ----
    conv_out, stats = pl.pallas_call(
        _conv_stats_kernel,
        grid=(n_t,),
        in_specs=[
            pl.BlockSpec((TH, K), lambda t: (t, 0)),
            # TODO(synk): single-buffer this constant-index block
            # (pipeline_mode=pl.Buffered(1)) once that path is settled.
            pl.BlockSpec((K, WC), lambda t: (0, 0)),
        ],
        out_specs=[
            pl.BlockSpec((TH, WC), lambda t: (t, 0)),
            pl.BlockSpec((1, 2, WC), lambda t: (t, 0, 0)),
        ],
        out_shape=[
            jax.ShapeDtypeStruct((TOT, WC), jnp.bfloat16),
            jax.ShapeDtypeStruct((n_t, 2, WC), jnp.float32),
        ],
        compiler_params=pltpu.CompilerParams(
            dimension_semantics=("parallel",),
            vmem_limit_bytes=vmem_limit),
    )(x_cat, w_cat)

    # ---- BN statistics reduction (tiny, plain JAX) ----
    count = TOT * Wo
    s = jnp.sum(stats, axis=0).reshape(2, Wo, Cout).sum(axis=1)       # (2, Cout)
    mean = s[0] / count
    var = jnp.maximum(s[1] / count - mean * mean, 0.0)  # biased batch variance
    # TODO(synk): E[x^2]-E[x]^2 can cancel for large counts/offsets; a shifted
    # two-pass reduction would be safer for training-grade BN.
    inv = jax.lax.rsqrt(var + BN_EPS)
    scale = gamma.astype(jnp.float32) * inv
    shift = beta.astype(jnp.float32) - mean * scale
    scale_t = jnp.tile(scale, Wo).reshape(1, WC)
    shift_t = jnp.tile(shift, Wo).reshape(1, WC)
    # NOTE: BN `momentum` only affects the running-stat update, not the
    # training-mode forward output, so it does not enter the kernels.

    # ---- pass 2: normalize + affine + ReLU, in place on conv_out (bf16) ----
    out = pl.pallas_call(
        _bn_relu_kernel,
        grid=(n_t,),
        in_specs=[
            pl.BlockSpec((TH, WC), lambda t: (t, 0)),
            pl.BlockSpec((1, WC), lambda t: (0, 0)),
            pl.BlockSpec((1, WC), lambda t: (0, 0)),
        ],
        out_specs=pl.BlockSpec((TH, WC), lambda t: (t, 0)),
        out_shape=jax.ShapeDtypeStruct((TOT, WC), jnp.bfloat16),
        input_output_aliases={0: 0},   # write BN+ReLU in place over conv_out
        compiler_params=pltpu.CompilerParams(
            dimension_semantics=("parallel",),
            vmem_limit_bytes=vmem_limit),
    )(conv_out, scale_t, shift_t)

    # Back to PyTorch's NCHW / f32.  The transpose is left to XLA (it fuses
    # with the f32 cast); writing NCHW from the kernel would force Wo-wide
    # (sub-128-lane) masked stores.
    return jnp.transpose(out.reshape(N, Ho, Wo, Cout), (0, 3, 1, 2)
                         ).astype(jnp.float32)


if __name__ == "__main__":
    # Module hyperparameters (small, consistent with the PyTorch module).
    inC, outC, kernel_size, padding, momentum = 4, 8, 3, 1, 0.1
    N, H, W = 2, 16, 16

    key = jax.random.PRNGKey(0)
    k_x, k_w, k_b = jax.random.split(key, 3)
    x = jax.random.normal(k_x, (N, inC, H, W), dtype=jnp.float32)
    conv_w = 0.1 * jax.random.normal(
        k_w, (outC, inC, kernel_size, kernel_size), dtype=jnp.float32)
    conv_b = 0.05 * jax.random.normal(k_b, (outC,), dtype=jnp.float32)
    bn_gamma = jnp.ones((outC,), jnp.float32)   # nn.BatchNorm2d default init
    bn_beta = jnp.zeros((outC,), jnp.float32)

    out = conv_bn_relu(x, conv_w, conv_b, bn_gamma, bn_beta, padding)
    out = jax.block_until_ready(out)

    # Pure-JAX f32 reference (Conv2d + training-mode BN + ReLU).  The kernel
    # uses bf16 matmul operands / bf16 activation storage (f32 accumulation),
    # hence the loosened tolerance.  The reference keeps the conv bias; the
    # kernel drops it because training-mode BN cancels it exactly.
    ref_conv = jax.lax.conv_general_dilated(
        x, conv_w, window_strides=(1, 1),
        padding=[(padding, padding), (padding, padding)],
        dimension_numbers=("NCHW", "OIHW", "NCHW"),
    ) + conv_b.reshape(1, -1, 1, 1)
    mu = ref_conv.mean(axis=(0, 2, 3), keepdims=True)
    var = ((ref_conv - mu) ** 2).mean(axis=(0, 2, 3), keepdims=True)
    ref = jnp.maximum(
        (ref_conv - mu) * jax.lax.rsqrt(var + BN_EPS)
        * bn_gamma.reshape(1, -1, 1, 1) + bn_beta.reshape(1, -1, 1, 1),
        0.0,
    )

    assert out.shape == (N, outC, H, W)
    assert jnp.allclose(out, ref, atol=5e-2, rtol=5e-2)
    print("KERNEL_OK")
</pallas_src>

<mosaic_0001>
module attributes {stable_mosaic.version = 11 : i64} {
  func.func @_conv_stats_kernel(%arg0: i32, %arg1: memref<16x216xbf16, #tpu.memory_space<vmem>>, %arg2: memref<216x128xbf16, #tpu.memory_space<vmem>>, %arg3: memref<16x128xbf16, #tpu.memory_space<vmem>>, %arg4: memref<1x2x128xf32, #tpu.memory_space<vmem>>) attributes {dimension_semantics = [#tpu.dimension_semantics<parallel>], iteration_bounds = array<i64: 2>, scalar_prefetch = 0 : i64, scratch_operands = 0 : i64, tpu.core_type = #tpu.core_type<tc>, window_params = [{transform_indices = @transform_0, window_bounds = array<i64: 16, 216>}, {pipeline_mode = #tpu.pipeline_mode<synchronous>, transform_indices = @transform_1, window_bounds = array<i64: 216, 128>}, {transform_indices = @transform_2, window_bounds = array<i64: 16, 128>}, {transform_indices = @transform_3, window_bounds = array<i64: 1, 2, 128>}]} {
    %c0 = arith.constant 0 : index
    %c0_0 = arith.constant 0 : index
    %0 = vector.load %arg1[%c0, %c0_0] : memref<16x216xbf16, #tpu.memory_space<vmem>>, vector<16x216xbf16>
    %c0_1 = arith.constant 0 : index
    %c0_2 = arith.constant 0 : index
    %1 = vector.load %arg2[%c0_1, %c0_2] : memref<216x128xbf16, #tpu.memory_space<vmem>>, vector<216x128xbf16>
    %cst = arith.constant dense<0.000000e+00> : vector<16x128xf32>
    %2 = tpu.matmul %0, %1, %cst {dimension_numbers = #tpu.dot_dimension_numbers<[1], [0], [0], [1], [0, 0, 1, 1], [], []>} : vector<16x216xbf16>, vector<216x128xbf16>, vector<16x128xf32> -> vector<16x128xf32>
    %cst_3 = arith.constant dense<0.000000e+00> : vector<128xf32>
    %3 = vector.multi_reduction <add>, %2, %cst_3 [0] : vector<16x128xf32> to vector<128xf32>
    %4 = vector.shape_cast %3 : vector<128xf32> to vector<1x128xf32>
    %5 = arith.mulf %2, %2 : vector<16x128xf32>
    %cst_4 = arith.constant dense<0.000000e+00> : vector<128xf32>
    %6 = vector.multi_reduction <add>, %5, %cst_4 [0] : vector<16x128xf32> to vector<128xf32>
    %7 = vector.shape_cast %6 : vector<128xf32> to vector<1x128xf32>
    %8 = tpu.concatenate %4, %7 in 0 : vector<1x128xf32>, vector<1x128xf32> -> vector<2x128xf32>
    %c0_5 = arith.constant 0 : index
    %c0_6 = arith.constant 0 : index
    %c0_7 = arith.constant 0 : index
    %9 = vector.load %arg4[%c0_5, %c0_6, %c0_7] : memref<1x2x128xf32, #tpu.memory_space<vmem>>, vector<1x2x128xf32>
    %10 = vector.shape_cast %9 : vector<1x2x128xf32> to vector<2x128xf32>
    %11 = vector.shape_cast %8 : vector<2x128xf32> to vector<1x2x128xf32>
    tpu.vector_store %arg4[%c0_5, %c0_6, %c0_7], %11 {strides = array<i32>} : memref<1x2x128xf32, #tpu.memory_space<vmem>>, vector<1x2x128xf32>,
    %12 = arith.truncf %2 : vector<16x128xf32> to vector<16x128xbf16>
    %c0_8 = arith.constant 0 : index
    %c0_9 = arith.constant 0 : index
    %13 = vector.load %arg3[%c0_8, %c0_9] : memref<16x128xbf16, #tpu.memory_space<vmem>>, vector<16x128xbf16>
    tpu.vector_store %arg3[%c0_8, %c0_9], %12 {strides = array<i32>} : memref<16x128xbf16, #tpu.memory_space<vmem>>, vector<16x128xbf16>,
    return
  }
  func.func @transform_0(%arg0: i32) -> (i32, i32) {
    %c0_i32 = arith.constant 0 : i32
    %c0_i32_0 = arith.constant 0 : i32
    return %arg0, %c0_i32 : i32, i32
  }
  func.func @transform_1(%arg0: i32) -> (i32, i32) {
    %c0_i32 = arith.constant 0 : i32
    %c0_i32_0 = arith.constant 0 : i32
    %c0_i32_1 = arith.constant 0 : i32
    return %c0_i32, %c0_i32_0 : i32, i32
  }
  func.func @transform_2(%arg0: i32) -> (i32, i32) {
    %c0_i32 = arith.constant 0 : i32
    %c0_i32_0 = arith.constant 0 : i32
    return %arg0, %c0_i32 : i32, i32
  }
  func.func @transform_3(%arg0: i32) -> (i32, i32, i32) {
    %c0_i32 = arith.constant 0 : i32
    %c0_i32_0 = arith.constant 0 : i32
    %c0_i32_1 = arith.constant 0 : i32
    return %arg0, %c0_i32, %c0_i32_0 : i32, i32, i32
  }
}

</mosaic_0001>

<llo_original>
// kernel: tpu_custom_call.1
$region0: #{tpu_custom_call.1}
  #allocation0 [shape = 'u32[]', space=smem, size = 0x4, offset = 0x4, fixed_abs, tag = 'smem constant byte address 0x4 - core index']
  #allocation1 [shape = 'u32[72,128]{1,0:T(1,128)}', space=vmem, size = 0x9000, scoped, tag = 'internal scratch']
  %s0 = inlined_call_operand.hbm [shape: bf16[32,216], index: 0, kind: input, shape index: {}]
  %s1 = inlined_call_operand.hbm [shape: bf16[216,128], index: 1, kind: input, shape index: {}]
  %s2 = inlined_call_operand.hbm [shape: bf16[32,128], index: 2, kind: output, shape index: {0}]
  %s3 = inlined_call_operand.hbm [shape: f32[2,2,128], index: 3, kind: output, shape index: {1}]
  %4 = xla_tuple %s2, %s3
  %s5 = sld [smem:[#allocation0]]
  $region57: #{tpu_custom_call.1} parent=0
    _
  %s7 = ssub.s32 1, %s5
  %s8 = scalar_select 0, %s7, %s5
  $region1: #{tpu_custom_call.1} parent=0
    #allocation2 [shape = 'u8[16384]{0}', space=vmem, size = 0x4000, scoped, tag = 'input window, operand 0']
    #allocation3 [shape = 's32[2]{0}', space=sflag, size = 0x8, scoped, tag = 'scoped memory for tpu_custom_call.1']
    #allocation4 [shape = 's32[2]{0}', space=sflag, size = 0x8, scoped, tag = 'scoped memory for tpu_custom_call.1']
    #allocation5 [shape = 'u8[55296]{0}', space=vmem, size = 0xd800, scoped, tag = 'input window, operand 1, single buffered']
    #allocation6 [shape = 's32[1]{0}', space=sflag, size = 0x4, scoped, tag = 'scoped memory for tpu_custom_call.1']
    #allocation7 [shape = 'u8[8192]{0}', space=vmem, size = 0x2000, scoped, tag = 'output window, operand 0']
    #allocation8 [shape = 'u8[2048]{0}', space=vmem, size = 0x800, scoped, tag = 'output window, operand 1']
    #allocation9 [shape = 's32[2]{0}', space=sflag, size = 0x8, scoped, tag = 'scoped memory for tpu_custom_call.1']
    %9 = vsyncpa [#allocation3], 0
    %s10 = scalar_lea.sflag [#allocation3], 1
    %11 = vsyncpa %s10, 0
    %12 = vsyncpa [#allocation6], 0
    %13 = vsyncpa [#allocation4], 0
    %s14 = scalar_lea.sflag [#allocation4], 1
    %15 = vsyncpa %s14, 0
    %16 = vsyncpa [#allocation9], 0
    %s17 = scalar_lea.sflag [#allocation9], 1
    %18 = vsyncpa %s17, 0
    loop: start=0, step=1, limit=4
    $region2: #{tpu_custom_call.1} parent=1 // loop_pre_header
      _
    $region3: #{tpu_custom_call.1} parent=1 // loop_header
      %s20 = sphi 0, %s24
      %p21 = scmp.ge.s32.totalorder %s20, 4
      %s30 = sphi 0, %s32
      %s33 = sphi 0, %s30
      %s34 = sphi 0, %s33
      %s50 = sphi 0, %s34
      %s54 = sphi 0, %s54
      %s56 = sphi 0, %s54
      %s57 = sphi 0, %s56
      %s71 = sphi 0, %s57
      %s77 = sphi 0, %s79
      %s80 = sphi 0, %s77
      %s81 = sphi 0, %s80
      %s97 = sphi 0, %s81
      %s103 = sphi 0, %s105
      %s106 = sphi 0, %s103
      %s107 = sphi 0, %s106
      %s123 = sphi 0, %s107
    $region4: #{tpu_custom_call.1} parent=1 // loop_header_branch
      %23 = sbr.rel (%p21) target = $region8
    $region5: #{tpu_custom_call.1} parent=1 // loop_body
      %s25 = ssub.s32 %s20, 1
      %s26 = ssub.s32 %s20, 2
      %s27 = sadd.s32 %s20, 1
      %s28 = ssub.s32 %s20, %s27
      %p29 = scmp.eq.s32.totalorder %s28, 0
      %s31 = sadd.s32 %s30, 1
      %s32 = scalar_select %p29, %s30, %s31
      %p35 = pneg %p29
      %p36 = scmp.eq.s32.totalorder %s20, 1
      %p37 = por %p35, %p36
      %p38 = scmp.ne.s32.totalorder %s30, %s33
      %p39 = scmp.eq.s32.totalorder %s20, 0
      %p40 = por %p38, %p39
      %p41 = scmp.ne.s32.totalorder %s30, %s33
      %p42 = scmp.eq.s32.totalorder %s25, 1
      %p43 = por %p41, %p42
      %p44 = scmp.ne.s32.totalorder %s33, %s34
      %p45 = scmp.eq.s32.totalorder %s25, 0
      %p46 = por %p44, %p45
      %p47 = scmp.ne.s32.totalorder %s33, %s34
      %p48 = scmp.eq.s32.totalorder %s26, 1
      %p49 = por %p47, %p48
      %p51 = scmp.ne.s32.totalorder %s34, %s50
      %p52 = scmp.eq.s32.totalorder %s26, 0
      %p53 = por %p51, %p52
      %s55 = sadd.s32 %s54, 1
      %p58 = scmp.eq.s32.totalorder %s20, 1
      %p59 = scmp.ne.s32.totalorder %s54, %s56
      %p60 = scmp.eq.s32.totalorder %s20, 0
      %p61 = por %p59, %p60
      %p62 = scmp.ne.s32.totalorder %s54, %s56
      %p63 = scmp.eq.s32.totalorder %s25, 1
      %p64 = por %p62, %p63
      %p65 = scmp.ne.s32.totalorder %s56, %s57
      %p66 = scmp.eq.s32.totalorder %s25, 0
      %p67 = por %p65, %p66
      %p68 = scmp.ne.s32.totalorder %s56, %s57
      %p69 = scmp.eq.s32.totalorder %s26, 1
      %p70 = por %p68, %p69
      %p72 = scmp.ne.s32.totalorder %s57, %s71
      %p73 = scmp.eq.s32.totalorder %s26, 0
      %p74 = por %p72, %p73
      %s75 = ssub.s32 %s20, %s27
      %p76 = scmp.eq.s32.totalorder %s75, 0
      %s78 = sadd.s32 %s77, 1
      %s79 = scalar_select %p76, %s77, %s78
      %p82 = pneg %p76
      %p83 = scmp.eq.s32.totalorder %s20, 1
      %p84 = por %p82, %p83
      %p85 = scmp.ne.s32.totalorder %s77, %s80
      %p86 = scmp.eq.s32.totalorder %s20, 0
      %p87 = por %p85, %p86
      %p88 = scmp.ne.s32.totalorder %s77, %s80
      %p89 = scmp.eq.s32.totalorder %s25, 1
      %p90 = por %p88, %p89
      %p91 = scmp.ne.s32.totalorder %s80, %s81
      %p92 = scmp.eq.s32.totalorder %s25, 0
      %p93 = por %p91, %p92
      %p94 = scmp.ne.s32.totalorder %s80, %s81
      %p95 = scmp.eq.s32.totalorder %s26, 1
      %p96 = por %p94, %p95
      %p98 = scmp.ne.s32.totalorder %s81, %s97
      %p99 = scmp.eq.s32.totalorder %s26, 0
      %p100 = por %p98, %p99
      %s101 = ssub.s32 %s20, %s27
      %p102 = scmp.eq.s32.totalorder %s101, 0
      %s104 = sadd.s32 %s103, 1
      %s105 = scalar_select %p102, %s103, %s104
      %p108 = pneg %p102
      %p109 = scmp.eq.s32.totalorder %s20, 1
      %p110 = por %p108, %p109
      %p111 = scmp.ne.s32.totalorder %s103, %s106
      %p112 = scmp.eq.s32.totalorder %s20, 0
      %p113 = por %p111, %p112
      %p114 = scmp.ne.s32.totalorder %s103, %s106
      %p115 = scmp.eq.s32.totalorder %s25, 1
      %p116 = por %p114, %p115
      %p117 = scmp.ne.s32.totalorder %s106, %s107
      %p118 = scmp.eq.s32.totalorder %s25, 0
      %p119 = por %p117, %p118
      %p120 = scmp.ne.s32.totalorder %s106, %s107
      %p121 = scmp.eq.s32.totalorder %s26, 1
      %p122 = por %p120, %p121
      %p124 = scmp.ne.s32.totalorder %s107, %s123
      %p125 = scmp.eq.s32.totalorder %s26, 0
      %p126 = por %p124, %p125
      %p127 = scmp.le.s32.totalorder 1, %s20
      %p128 = scmp.lt.s32.totalorder %s20, 3
      %p129 = pnand %p127, %p128
      %p130 = pneg %p129
      // Predicated region
      $region9: #{tpu_custom_call.1} parent=5 // pred_check
        _
      $region10: #{tpu_custom_call.1} parent=5 // pred_check_branch
        %132 = sbr.rel (%p129) target = $region12
      $region11: #{tpu_custom_call.1} parent=5 // pred_region
        %s133 = ssub.s32 %s20, 1
        // Predicated region
        $region13: #{tpu_custom_call.1} parent=11 // pred_check
          %p134 = pneg %p67
        $region14: #{tpu_custom_call.1} parent=11 // pred_check_branch
          %136 = sbr.rel (%p134) target = $region16
        $region15: #{tpu_custom_call.1} parent=11 // pred_region
          %138 = vsyncadd [#allocation6], 0
          %s139 = sshll.u32 %s1, 4
          %s140 = int_to_ptr.hbm [resolvable:$true] %s139
          %s141 = sshll.u32 [#allocation5], 4
          %s142 = int_to_ptr.vmem [resolvable:$true] %s141
          %147 = dma.hbm_to_vmem [thread:$0]  %s140, 1728, %s142, [#allocation6], 64, 64, 4
        $region16: #{tpu_custom_call.1} parent=11 // pred_fallthru
          _
      $region12: #{tpu_custom_call.1} parent=5 // pred_fallthru
        _
      %p148 = scmp.lt.s32.totalorder %s20, 2
      // Predicated region
      $region17: #{tpu_custom_call.1} parent=5 // pred_check
        %p149 = pneg %p148
      $region18: #{tpu_custom_call.1} parent=5 // pred_check_branch
        %151 = sbr.rel (%p149) target = $region20
      $region19: #{tpu_custom_call.1} parent=5 // pred_region
        // Predicated region
        $region21: #{tpu_custom_call.1} parent=19 // pred_check
          %p152 = pneg %p40
        $region22: #{tpu_custom_call.1} parent=19 // pred_check_branch
          %154 = sbr.rel (%p152) target = $region24
        $region23: #{tpu_custom_call.1} parent=19 // pred_region
          %s155 = sand.u32 %s30, 1
          %s156 = scalar_lea.sflag [#allocation3], %s155
          %s157 = sand.u32 %s30, 1
          %s158 = smul.addr %s157, 16
          %s159 = scalar_lea.vmem [#allocation2], %s158
          %s160 = smul.u32 2, %s20
          %162 = vsyncadd %s156, 0
          %s163 = smul.addr %s160, 2
          %s164 = smul.addr %s163, 4
          %s165 = scalar_lea.hbm %s0, %s164
          %s166 = sshll.u32 %s165, 4
          %s167 = int_to_ptr.hbm [resolvable:$true] %s166
          %s168 = sshll.u32 %s159, 4
          %s169 = int_to_ptr.vmem [resolvable:$true] %s168
          %174 = dma.hbm_to_vmem [thread:$0]  %s167, 256, %s169, %s156, 128, 128, 8
        $region24: #{tpu_custom_call.1} parent=19 // pred_fallthru
          _
      $region20: #{tpu_custom_call.1} parent=5 // pred_fallthru
        _
      %p175 = scmp.le.s32.totalorder 1, %s20
      %p176 = scmp.lt.s32.totalorder %s20, 3
      %p177 = pnand %p175, %p176
      %p178 = pneg %p177
      // Predicated region
      $region25: #{tpu_custom_call.1} parent=5 // pred_check
        _
      $region26: #{tpu_custom_call.1} parent=5 // pred_check_branch
        %180 = sbr.rel (%p177) target = $region28
      $region27: #{tpu_custom_call.1} parent=5 // pred_region
        %s181 = ssub.s32 %s20, 1
        %s182 = sand.u32 %s33, 1
        %s183 = scalar_lea.sflag [#allocation3], %s182
        %s184 = sand.u32 %s33, 1
        %s185 = smul.addr %s184, 16
        %s186 = scalar_lea.vmem [#allocation2], %s185
        // Predicated region
        $region29: #{tpu_custom_call.1} parent=27 // pred_check
          %p187 = pneg %p46
        $region30: #{tpu_custom_call.1} parent=27 // pred_check_branch
          %189 = sbr.rel (%p187) target = $region32
        $region31: #{tpu_custom_call.1} parent=27 // pred_region
          %191 = dma.done %s183, 256
        $region32: #{tpu_custom_call.1} parent=27 // pred_fallthru
          _
        // Predicated region
        $region33: #{tpu_custom_call.1} parent=27 // pred_check
          %p192 = pneg %p67
        $region34: #{tpu_custom_call.1} parent=27 // pred_check_branch
          %194 = sbr.rel (%p192) target = $region36
        $region35: #{tpu_custom_call.1} parent=27 // pred_region
          %196 = dma.done [#allocation6], 1728
        $region36: #{tpu_custom_call.1} parent=27 // pred_fallthru
          _
        %s197 = sand.u32 %s33, 1
        %s198 = scalar_lea.sflag [#allocation3], %s197
        %s199 = sand.u32 %s33, 1
        %s200 = smul.addr %s199, 16
        %s201 = scalar_lea.vmem [#allocation2], %s200
        %p202 = pneg %p46
        %p203 = pneg %p43
        %p204 = pneg %p67
        %p205 = pneg %p64
        %p206 = pneg %p93
        %p207 = pneg %p90
        %s208 = sand.u32 %s80, 1
        %s209 = scalar_lea.sflag [#allocation4], %s208
        %s210 = sand.u32 %s80, 1
        %s211 = smul.addr %s210, 8
        %s212 = scalar_lea.vmem [#allocation7], %s211
        %p213 = pneg %p119
        %p214 = pneg %p116
        %s215 = sand.u32 %s106, 1
        %s216 = scalar_lea.sflag [#allocation9], %s215
        %s217 = sand.u32 %s106, 1
        %s218 = smul.addr %s217, 2
        %s219 = scalar_lea.vmem [#allocation8], %s218
        %s220 = smul.u32 2, %s25
        %s221 = smul.u32 2, %s25
        %v223 = vld [vmem:[%s186] sm:$0xff]
        %v224 = vld [vmem:[%s186 + $0x8] sm:$0xff]
        %v225 = vld [vmem:[#allocation5] sm:$0xf]
        %v226 = vld [vmem:[#allocation5 + $0x4] sm:$0xf]
        %v227 = vld [vmem:[#allocation5 + $0x8] sm:$0xf]
        %v228 = vld [vmem:[#allocation5 + $0xc] sm:$0xf]
        %v229 = vld [vmem:[#allocation5 + $0x10] sm:$0xf]
        %v230 = vld [vmem:[#allocation5 + $0x14] sm:$0xf]
        %v231 = vld [vmem:[#allocation5 + $0x18] sm:$0xf]
        %v232 = vld [vmem:[#allocation5 + $0x1c] sm:$0xf]
        %v233 = vld [vmem:[#allocation5 + $0x20] sm:$0xf]
        %v234 = vld [vmem:[#allocation5 + $0x24] sm:$0xf]
        %v235 = vld [vmem:[#allocation5 + $0x28] sm:$0xf]
        %v236 = vld [vmem:[#allocation5 + $0x2c] sm:$0xf]
        %v237 = vld [vmem:[#allocation5 + $0x30] sm:$0xf]
        %v238 = vld [vmem:[#allocation5 + $0x34] sm:$0xf]
        %v239 = vld [vmem:[#allocation5 + $0x38] sm:$0xf]
        %v240 = vld [vmem:[#allocation5 + $0x3c] sm:$0xf]
        %v241 = vld [vmem:[#allocation5 + $0x40] sm:$0xf]
        %v242 = vld [vmem:[#allocation5 + $0x44] sm:$0xf]
        %v243 = vld [vmem:[#allocation5 + $0x48] sm:$0xf]
        %v244 = vld [vmem:[#allocation5 + $0x4c] sm:$0xf]
        %v245 = vld [vmem:[#allocation5 + $0x50] sm:$0xf]
        %v246 = vld [vmem:[#allocation5 + $0x54] sm:$0xf]
        %v247 = vld [vmem:[#allocation5 + $0x58] sm:$0xf]
        %v248 = vld [vmem:[#allocation5 + $0x5c] sm:$0xf]
        %v249 = vld [vmem:[#allocation5 + $0x60] sm:$0xf]
        %v250 = vld [vmem:[#allocation5 + $0x64] sm:$0xf]
        %v251 = vld [vmem:[#allocation5 + $0x68] sm:$0xf]
        %v254 = vunpack.c.l.b16 %v223
        %v255 = vunpack.c.h.b16 %v223
        %v256 = vunpack.c.l.b16 %v224
        %v257 = vunpack.c.h.b16 %v224
        %v258 = vpack.c.b16 %v256, %v254
        %v259 = vpack.c.b16 %v257, %v255
        %v288 = vunpack.c.l.b16 %v225
        %v289 = vunpack.c.l.b16 %v226
        %v290 = vunpack.c.l.b16 %v227
        %v291 = vunpack.c.l.b16 %v228
        %v292 = vunpack.c.l.b16 %v229
        %v293 = vunpack.c.l.b16 %v230
        %v294 = vunpack.c.l.b16 %v231
        %v295 = vunpack.c.l.b16 %v232
        %v296 = vunpack.c.l.b16 %v233
        %v297 = vunpack.c.l.b16 %v234
        %v298 = vunpack.c.l.b16 %v235
        %v299 = vunpack.c.l.b16 %v236
        %v300 = vunpack.c.l.b16 %v237
        %v301 = vunpack.c.l.b16 %v238
        %v302 = vunpack.c.l.b16 %v239
        %v303 = vunpack.c.l.b16 %v240
        %v304 = vunpack.c.l.b16 %v241
        %v305 = vunpack.c.l.b16 %v242
        %v306 = vunpack.c.l.b16 %v243
        %v307 = vunpack.c.l.b16 %v244
        %v308 = vunpack.c.l.b16 %v245
        %v309 = vunpack.c.l.b16 %v246
        %v310 = vunpack.c.l.b16 %v247
        %v311 = vunpack.c.l.b16 %v248
        %v312 = vunpack.c.l.b16 %v249
        %v313 = vunpack.c.l.b16 %v250
        %v314 = vunpack.c.l.b16 %v251
        %v315 = vpack.c.b16 %v289, %v288
        %v316 = vpack.c.b16 %v291, %v290
        %v317 = vpack.c.b16 %v293, %v292
        %v318 = vpack.c.b16 %v295, %v294
        %v319 = vpack.c.b16 %v297, %v296
        %v320 = vpack.c.b16 %v299, %v298
        %v321 = vpack.c.b16 %v301, %v300
        %v322 = vpack.c.b16 %v303, %v302
        %v323 = vpack.c.b16 %v305, %v304
        %v324 = vpack.c.b16 %v307, %v306
        %v325 = vpack.c.b16 %v309, %v308
        %v326 = vpack.c.b16 %v311, %v310
        %v327 = vpack.c.b16 %v313, %v312
        %v328 = vpack.c.b16 %v314, %v314
        %vm342 = vcmask 719872
        %v344 = vsel %vm342, %v259, 0
        %vm346 = vcmask 1043456
        %v348 = vsel %vm346, %v328, 0
        %350 = vmatpush.bf16.msra.mxu0 %v322
        %351 = vmatpush.bf16.msra.mxu0 %v321
        %352 = vmatpush.bf16.msra.mxu0 %v320
        %353 = vmatpush.bf16.msra.mxu0 %v319
        %354 = vmatpush.bf16.msra.mxu0 %v318
        %355 = vmatpush.bf16.msra.mxu0 %v317
        %356 = vmatpush.bf16.msra.mxu0 %v316
        %357 = vmatpush.bf16.msra.mxu0 %v315
        %358 = vmatmul.bf16.gmra.mxu0 %v258
        %v359 = vpop.f32.mrf.mxu0
        %v360 = vadd.f32 0.0, %v359
        %v361 = vpop.f32.mrf.mxu0
        %v362 = vadd.f32 0.0, %v361
        %363 = vdwg.mxu0
        %364 = vmatpush.bf16.msra.mxu0 0
        %365 = vmatpush.bf16.msra.mxu0 0
        %366 = vmatpush.bf16.msra.mxu0 %v348
        %367 = vmatpush.bf16.msra.mxu0 %v327
        %368 = vmatpush.bf16.msra.mxu0 %v326
        %369 = vmatpush.bf16.msra.mxu0 %v325
        %370 = vmatpush.bf16.msra.mxu0 %v324
        %371 = vmatpush.bf16.msra.mxu0 %v323
        %372 = vmatmul.bf16.gmra.mxu0 %v344
        %v373 = vpop.f32.mrf.mxu0
        %v374 = vadd.f32 %v360, %v373
        %v375 = vpop.f32.mrf.mxu0
        %v376 = vadd.f32 %v362, %v375
        %377 = vdwg.mxu0
        %v378 = vadd.f32 %v374, %v376
        %v379 = vrot.slane %v378, 4
        %v380 = vadd.f32 %v378, %v379
        %v381 = vrot.slane %v380, 2
        %v382 = vadd.f32 %v380, %v381
        %v383 = vrot.slane %v382, 1
        %v384 = vadd.f32 %v382, %v383
        %v385 = vmul.f32 %v374, %v374
        %v386 = vmul.f32 %v376, %v376
        %v387 = vadd.f32 %v385, %v386
        %v388 = vrot.slane %v387, 4
        %v389 = vadd.f32 %v387, %v388
        %v390 = vrot.slane %v389, 2
        %v391 = vadd.f32 %v389, %v390
        %v392 = vrot.slane %v391, 1
        %v393 = vadd.f32 %v391, %v392
        %vm394 = vcmask 1040384
        %v395 = vsel %vm394, %v384, %v393
        %396 = vst [vmem:[%s219] sm:$0x3] %v395
        %v397 = vpack.c.bf16 %v374, %v374
        %v398 = vpack.c.bf16 %v376, %v376
        %399 = vst [vmem:[%s212] sm:$0xf] %v397
        %400 = vst [vmem:[%s212 + $0x4] sm:$0xf] %v398
        %s401 = sand.u32 %s80, 1
        %s402 = scalar_lea.sflag [#allocation4], %s401
        %s403 = sand.u32 %s80, 1
        %s404 = smul.addr %s403, 8
        %s405 = scalar_lea.vmem [#allocation7], %s404
        %s406 = sand.u32 %s106, 1
        %s407 = scalar_lea.sflag [#allocation9], %s406
        %s408 = sand.u32 %s106, 1
        %s409 = smul.addr %s408, 2
        %s410 = scalar_lea.vmem [#allocation8], %s409
        // Predicated region
        $region37: #{tpu_custom_call.1} parent=27 // pred_check
          %p411 = pneg %p90
        $region38: #{tpu_custom_call.1} parent=27 // pred_check_branch
          %413 = sbr.rel (%p411) target = $region40
        $region39: #{tpu_custom_call.1} parent=27 // pred_region
          %s414 = smul.u32 2, %s25
          %416 = vsyncadd %s402, 0
          %s417 = smul.addr %s414, 4
          %s418 = scalar_lea.hbm %s2, %s417
          %s419 = sshll.u32 %s405, 4
          %s420 = int_to_ptr.vmem [resolvable:$true] %s419
          %s421 = sshll.u32 %s418, 4
          %s422 = int_to_ptr.hbm [resolvable:$true] %s421
          %427 = dma.vmem_to_hbm [thread:$0]  %s420, 128, %s422, %s402, 64, 64, 4
        $region40: #{tpu_custom_call.1} parent=27 // pred_fallthru
          _
        // Predicated region
        $region41: #{tpu_custom_call.1} parent=27 // pred_check
          %p428 = pneg %p116
        $region42: #{tpu_custom_call.1} parent=27 // pred_check_branch
          %430 = sbr.rel (%p428) target = $region44
        $region43: #{tpu_custom_call.1} parent=27 // pred_region
          %432 = vsyncadd %s407, 0
          %s433 = smul.addr %s25, 2
          %s434 = scalar_lea.hbm %s3, %s433
          %s436 = sshll.u32 %s410, 4
          %s437 = int_to_ptr.vmem [resolvable:$true] %s436
          %s438 = sshll.u32 %s434, 4
          %s439 = int_to_ptr.hbm [resolvable:$true] %s438
          %441 = dma.vmem_to_hbm [thread:$0]  %s437, 32, %s439, %s407
        $region44: #{tpu_custom_call.1} parent=27 // pred_fallthru
          _
      $region28: #{tpu_custom_call.1} parent=5 // pred_fallthru
        _
      %p442 = scmp.le.s32.totalorder 2, %s20
      // Predicated region
      $region45: #{tpu_custom_call.1} parent=5 // pred_check
        %p443 = pneg %p442
      $region46: #{tpu_custom_call.1} parent=5 // pred_check_branch
        %445 = sbr.rel (%p443) target = $region48
      $region47: #{tpu_custom_call.1} parent=5 // pred_region
        %s446 = ssub.s32 %s20, 2
        // Predicated region
        $region49: #{tpu_custom_call.1} parent=47 // pred_check
          %p447 = pneg %p96
        $region50: #{tpu_custom_call.1} parent=47 // pred_check_branch
          %449 = sbr.rel (%p447) target = $region52
        $region51: #{tpu_custom_call.1} parent=47 // pred_region
          %s450 = sand.u32 %s81, 1
          %s451 = scalar_lea.sflag [#allocation4], %s450
          %s452 = sand.u32 %s81, 1
          %s453 = smul.addr %s452, 8
          %s454 = scalar_lea.vmem [#allocation7], %s453
          %456 = dma.done %s451, 128
        $region52: #{tpu_custom_call.1} parent=47 // pred_fallthru
          _
        // Predicated region
        $region53: #{tpu_custom_call.1} parent=47 // pred_check
          %p457 = pneg %p122
        $region54: #{tpu_custom_call.1} parent=47 // pred_check_branch
          %459 = sbr.rel (%p457) target = $region56
        $region55: #{tpu_custom_call.1} parent=47 // pred_region
          %s460 = sand.u32 %s107, 1
          %s461 = scalar_lea.sflag [#allocation9], %s460
          %s462 = sand.u32 %s107, 1
          %s463 = smul.addr %s462, 2
          %s464 = scalar_lea.vmem [#allocation8], %s463
          %466 = dma.done %s461, 32
        $region56: #{tpu_custom_call.1} parent=47 // pred_fallthru
          _
      $region48: #{tpu_custom_call.1} parent=5 // pred_fallthru
        _
    $region6: #{tpu_custom_call.1} parent=1 // loop_footer
      %s24 = sadd.s32 1, %s20
    $region7: #{tpu_custom_call.1} parent=1 // loop_footer_branch
      %19 = sbr.rel target = $region3
    $region8: #{tpu_custom_call.1} parent=1 // loop_exit
      _
    %467 = vsyncpa [#allocation3], 1
    %s468 = scalar_lea.sflag [#allocation3], 1
    %469 = vsyncpa %s468, 1
    %470 = vsyncpa [#allocation6], 1
    %471 = vsyncpa [#allocation4], 1
    %s472 = scalar_lea.sflag [#allocation4], 1
    %473 = vsyncpa %s472, 1
    %474 = vsyncpa [#allocation9], 1
    %s475 = scalar_lea.sflag [#allocation9], 1
    %476 = vsyncpa %s475, 1

</llo_original>
